<compile_context>
chip_gen: v5e
topology: v5e:2x2
jax: 0.10.0
libtpu: 0.0.40
codegen_flags: <defaults>
</compile_context>

<pallas_src>
import functools

import jax
import jax.numpy as jnp
from jax.experimental import pallas as pl
from jax.experimental.pallas import tpu as pltpu


_MIB = 1 << 20
_ALIGN = 256            # node-count / row-tile alignment (multiple of 128 and of MXU 256)


def _round_up(x, m):
    return (x + m - 1) // m * m


def _tpu_vmem_info():
    """Return (vmem_capacity_bytes, prefer_tiled). Conservative defaults if query fails."""
    cap = 64 * _MIB                       # conservative (v7x per-TC) default
    kind = ""
    try:
        kind = jax.devices()[0].device_kind.lower()
    except Exception:
        pass
    try:
        info = pltpu.get_tpu_info()
        cap = int(getattr(info, "vmem_capacity_bytes", cap)) or cap
    except Exception:
        pass
    # v7x: 2 TensorCores, 64 MiB/TC -> prefer the row-tiled (megacore-sharded) path.
    prefer_tiled = ("v7" in kind) or (cap < 100 * _MIB)
    return cap, prefer_tiled


def _fused_bytes(n_pad, h, lanes):
    """VMEM footprint of the grid-less fused kernel (inputs, output, f32/bf16 intermediates)."""
    return (n_pad * n_pad * 2                           # A_hat bf16 (resident, used twice)
            + n_pad * h * 2                             # xw1 bf16
            + h * lanes * 2 + (h + lanes) * 4           # Wcomb bf16, b1/bcomb f32
            + n_pad * lanes * 4                         # output y f32
            + n_pad * (2 * h * 4 + lanes * (4 + 2))     # A@xw1, h1 (f32); comb (f32); z (bf16)
            + 2 * _MIB)                                 # compiler scratch slack


def _tiled_bytes(tm, n_pad, h, lanes):
    """Per-pass VMEM footprint of the row-tiled path (double-buffered streamed operands)."""
    p1 = (2 * tm * n_pad * 2 + 2 * n_pad * h * 2 + 2 * tm * lanes * 2
          + tm * (h * 4 + lanes * 4))
    p2 = (2 * tm * n_pad * 2 + 2 * n_pad * lanes * 2 + 2 * tm * lanes * 4
          + tm * lanes * 4)
    return max(p1, p2) + 2 * _MIB


def make_plan(num_nodes, hidden_channels, *, force_tiled=False, row_tile=None):
    """Decide (once per graph) fused-vs-tiled, padding and tile sizes from the TPU generation."""
    cap, prefer_tiled = _tpu_vmem_info()
    lanes = _round_up(hidden_channels + 1, 128)         # emb cols 0..H-1, logit col H
    vmem_limit = cap - 16 * _MIB                        # ~112 MiB on v5e/v6e, ~48 MiB on v7x
    fused_budget = (cap * 3) // 4                       # ~96 MiB on 128-MiB parts

    n_align = _round_up(max(num_nodes, 1), _ALIGN)
    use_fused = ((not force_tiled) and (not prefer_tiled)
                 and _fused_bytes(n_align, hidden_channels, lanes) <= fused_budget)
    if use_fused:
        return dict(n=num_nodes, n_pad=n_align, tm=None, lanes=lanes,
                    use_fused=True, vmem_limit=int(vmem_limit))

    # Row-tiled path: generation-aware target tile, shrunk until it fits the VMEM limit.
    target_tm = 512 if cap <= 64 * _MIB else 1024
    if row_tile is not None:
        target_tm = _round_up(row_tile, _ALIGN)
    tm = min(target_tm, n_align)
    n_pad = _round_up(num_nodes, tm)
    while tm > _ALIGN and _tiled_bytes(tm, n_pad, hidden_channels, lanes) > vmem_limit - 8 * _MIB:
        tm //= 2
        n_pad = _round_up(num_nodes, tm)
    return dict(n=num_nodes, n_pad=n_pad, tm=tm, lanes=lanes,
                use_fused=False, vmem_limit=int(vmem_limit))


def prepare_graph(adj, plan):
    """Pad + bf16-cast A_hat ONCE per graph (hoisted out of the per-forward path).
    Padded rows AND columns are zero (layer-2 correctness relies on zero padded columns)."""
    n, n_pad = plan["n"], plan["n_pad"]
    return jnp.zeros((n_pad, n_pad), jnp.bfloat16).at[:n, :n].set(adj.astype(jnp.bfloat16))


# ----------------------------------------------------------------------------
# Kernels
# ----------------------------------------------------------------------------

def fused_gcn_net_kernel(adj_ref, xw1_ref, b1_ref, wcomb_ref, bcomb_ref, y_ref, *, logit_col):
    """A_hat resident in VMEM (loaded once, used by both layers). Single lane-dense output."""
    adj = adj_ref[...]                                                       # [Np, Np] bf16
    h1 = jnp.tanh(jnp.dot(adj, xw1_ref[...],
                          preferred_element_type=jnp.float32) + b1_ref[...])  # [Np, H] f32
    z = jnp.dot(h1.astype(jnp.bfloat16), wcomb_ref[...],
                preferred_element_type=jnp.float32)                          # [Np, lanes] f32
    comb = jnp.dot(adj, z.astype(jnp.bfloat16),
                   preferred_element_type=jnp.float32) + bcomb_ref[...]      # emb | logit
    lane = jax.lax.broadcasted_iota(jnp.int32, comb.shape, 1)
    y_ref[...] = jnp.where(lane == logit_col, jax.nn.sigmoid(comb), comb)


def gcn_pass1_kernel(adj_ref, xw1_ref, b1_ref, wcomb_ref, z_ref):
    """Row-tiled pass 1: z[rows] = tanh(A_hat[rows]@xw1 + b1) @ Wcomb, stored bf16 lane-dense."""
    h1 = jnp.tanh(jnp.dot(adj_ref[...], xw1_ref[...],
                          preferred_element_type=jnp.float32) + b1_ref[...])
    z_ref[...] = jnp.dot(h1.astype(jnp.bfloat16), wcomb_ref[...],
                         preferred_element_type=jnp.float32).astype(z_ref.dtype)


def gcn_pass2_kernel(adj_ref, z_ref, bcomb_ref, y_ref, *, logit_col):
    """Row-tiled pass 2: one K=N matmul gives emb cols and the fc logit col; sigmoid on col H."""
    comb = jnp.dot(adj_ref[...], z_ref[...],
                   preferred_element_type=jnp.float32) + bcomb_ref[...]
    lane = jax.lax.broadcasted_iota(jnp.int32, comb.shape, 1)
    y_ref[...] = jnp.where(lane == logit_col, jax.nn.sigmoid(comb), comb)


# ----------------------------------------------------------------------------
# Wrapper
# ----------------------------------------------------------------------------

def net_forward(adj_bf, x, params, plan):
    """adj_bf: prepared (padded, bf16) A_hat from prepare_graph(); x: [N, Cin] f32.
    Returns (emb [N, H] f32, out [N, 1] f32) matching Net.forward."""
    n, n_pad, lanes = plan["n"], plan["n_pad"], plan["lanes"]
    h = params["w2"].shape[1]

    # Tiny per-call prep (O(N*H) / O(H^2), negligible vs. the N^2 A_hat stream).
    xw1 = jnp.zeros((n_pad, h), jnp.float32).at[:n].set(x @ params["w1"])
    xw1_bf = xw1.astype(jnp.bfloat16)
    b1 = params["b1"].reshape(1, h).astype(jnp.float32)

    w2 = params["w2"]
    b2 = params["b2"].reshape(1, h)
    wfc = params["wfc"]
    bfc = params["bfc"].reshape(1, 1)
    # Fold the FC head into W2: columns 0..H-1 produce emb, column H produces the logit.
    wcomb = jnp.zeros((h, lanes), jnp.float32).at[:, :h].set(w2).at[:, h].set((w2 @ wfc)[:, 0])
    wcomb_bf = wcomb.astype(jnp.bfloat16)
    bcomb = jnp.zeros((1, lanes), jnp.float32).at[:, :h].set(b2).at[:, h].set(
        (b2 @ wfc + bfc)[:, 0])

    vmem = pl.BlockSpec(memory_space=pltpu.MemorySpace.VMEM)

    if plan["use_fused"]:
        y = pl.pallas_call(
            functools.partial(fused_gcn_net_kernel, logit_col=h),
            out_shape=jax.ShapeDtypeStruct((n_pad, lanes), jnp.float32),
            in_specs=[vmem, vmem, vmem, vmem, vmem],
            out_specs=vmem,
            compiler_params=pltpu.CompilerParams(vmem_limit_bytes=plan["vmem_limit"]),
        )(adj_bf, xw1_bf, b1, wcomb_bf, bcomb)
    else:
        tm = plan["tm"]
        grid = (n_pad // tm,)
        cp = pltpu.CompilerParams(dimension_semantics=("parallel",),
                                  vmem_limit_bytes=plan["vmem_limit"])
        # Pass 1: stream A_hat row tiles (BlockSpec double-buffered), emit z = h1 @ Wcomb.
        z = pl.pallas_call(
            gcn_pass1_kernel,
            out_shape=jax.ShapeDtypeStruct((n_pad, lanes), jnp.bfloat16),
            grid=grid,
            in_specs=[pl.BlockSpec((tm, n_pad), lambda i: (i, 0)),
                      pl.BlockSpec((n_pad, h), lambda i: (0, 0)),
                      pl.BlockSpec((1, h), lambda i: (0, 0)),
                      pl.BlockSpec((h, lanes), lambda i: (0, 0))],
            out_specs=pl.BlockSpec((tm, lanes), lambda i: (i, 0)),
            compiler_params=cp,
        )(adj_bf, xw1_bf, b1, wcomb_bf)
        # Pass 2: needs all of z, so A_hat is re-streamed; single matmul per row tile.
        # (If xprof shows exposed DMA on the A_hat stream, add pipeline_mode=pl.Buffered(3).)
        y = pl.pallas_call(
            functools.partial(gcn_pass2_kernel, logit_col=h),
            out_shape=jax.ShapeDtypeStruct((n_pad, lanes), jnp.float32),
            grid=grid,
            in_specs=[pl.BlockSpec((tm, n_pad), lambda i: (i, 0)),
                      pl.BlockSpec((n_pad, lanes), lambda i: (0, 0)),
                      pl.BlockSpec((1, lanes), lambda i: (0, 0))],
            out_specs=pl.BlockSpec((tm, lanes), lambda i: (i, 0)),
            compiler_params=cp,
        )(adj_bf, z, bcomb)

    emb = y[:n, :h]
    out = y[:n, h:h + 1]
    return emb, out


# ----------------------------------------------------------------------------
# Plain-JAX glue (graph normalization + synthetic params)
# ----------------------------------------------------------------------------

def build_norm_adj(edge_index, num_nodes):
    """Dense PyG-style GCN normalization: A_hat = D^{-1/2}(A + I)D^{-1/2}."""
    src, dst = edge_index[0], edge_index[1]
    a = jnp.zeros((num_nodes, num_nodes), jnp.float32).at[dst, src].set(1.0)
    a = a + jnp.eye(num_nodes, dtype=jnp.float32)          # add self loops
    deg = a.sum(axis=1)
    dinv = jnp.where(deg > 0, 1.0 / jnp.sqrt(deg), 0.0)
    return dinv[:, None] * a * dinv[None, :]


def init_params(key, in_channels, hidden_channels):
    k1, k2, k3 = jax.random.split(key, 3)

    def glorot(k, shape):
        fan_in, fan_out = shape[0], shape[1]
        s = jnp.sqrt(6.0 / (fan_in + fan_out))
        return jax.random.uniform(k, shape, jnp.float32, -s, s)

    return {
        "w1": glorot(k1, (in_channels, hidden_channels)),
        "b1": jnp.zeros((1, hidden_channels), jnp.float32),
        "w2": glorot(k2, (hidden_channels, hidden_channels)),
        "b2": jnp.zeros((1, hidden_channels), jnp.float32),
        "wfc": glorot(k3, (hidden_channels, 1)),
        "bfc": jnp.zeros((1, 1), jnp.float32),
    }


if __name__ == "__main__":
    num_nodes = 16
    in_channels = 8
    hidden_channels = 32

    key = jax.random.PRNGKey(0)
    kx, kp = jax.random.split(key)

    x = jax.random.normal(kx, (num_nodes, in_channels), dtype=jnp.float32)

    # Deterministic undirected edge list: ring + chords (no self loops / duplicates).
    src_list, dst_list = [], []
    for i in range(num_nodes):
        for j in (1, 5):
            a, b = i, (i + j) % num_nodes
            src_list += [a, b]
            dst_list += [b, a]
    edge_index = jnp.array([src_list, dst_list], dtype=jnp.int32)   # [2, E]

    adj = build_norm_adj(edge_index, num_nodes)
    params = init_params(kp, in_channels, hidden_channels)

    # Plain-JAX f32 reference of Net.forward
    h1_r = jnp.tanh(adj @ (x @ params["w1"]) + params["b1"])
    emb_r = adj @ (h1_r @ params["w2"]) + params["b2"]
    out_r = jax.nn.sigmoid(emb_r @ params["wfc"] + params["bfc"])

    # Default (generation-aware) plan: fused/resident on 128-MiB-VMEM parts, tiled on v7x.
    plan = make_plan(num_nodes, hidden_channels)
    adj_bf = prepare_graph(adj, plan)                      # per-graph, cached by the caller
    emb, out = net_forward(adj_bf, x, params, plan)

    # Explicitly exercise the row-tiled streaming path as well.
    plan_t = make_plan(num_nodes, hidden_channels, force_tiled=True, row_tile=256)
    adj_bf_t = prepare_graph(adj, plan_t)
    emb_t, out_t = net_forward(adj_bf_t, x, params, plan_t)

    jax.block_until_ready((emb, out, emb_t, out_t))

    assert emb.shape == (num_nodes, hidden_channels)
    assert out.shape == (num_nodes, 1)
    assert bool(jnp.all((out >= 0.0) & (out <= 1.0)))
    assert bool(jnp.allclose(emb, emb_r, atol=5e-2, rtol=5e-2))
    assert bool(jnp.allclose(out, out_r, atol=5e-2, rtol=5e-2))
    assert bool(jnp.allclose(emb_t, emb_r, atol=5e-2, rtol=5e-2))
    assert bool(jnp.allclose(out_t, out_r, atol=5e-2, rtol=5e-2))
    print("KERNEL_OK")
</pallas_src>

<mosaic_0001>
module attributes {stable_mosaic.version = 11 : i64} {
  func.func @gcn_pass1_kernel(%arg0: i32, %arg1: memref<256x256xbf16, #tpu.memory_space<vmem>>, %arg2: memref<256x32xbf16, #tpu.memory_space<vmem>>, %arg3: memref<1x32xf32, #tpu.memory_space<vmem>>, %arg4: memref<32x128xbf16, #tpu.memory_space<vmem>>, %arg5: memref<256x128xbf16, #tpu.memory_space<vmem>>) attributes {dimension_semantics = [#tpu.dimension_semantics<parallel>], iteration_bounds = array<i64: 1>, scalar_prefetch = 0 : i64, scratch_operands = 0 : i64, tpu.core_type = #tpu.core_type<tc>, window_params = [{transform_indices = @transform_0, window_bounds = array<i64: 256, 256>}, {pipeline_mode = #tpu.pipeline_mode<synchronous>, transform_indices = @transform_1, window_bounds = array<i64: 256, 32>}, {pipeline_mode = #tpu.pipeline_mode<synchronous>, transform_indices = @transform_2, window_bounds = array<i64: 1, 32>}, {pipeline_mode = #tpu.pipeline_mode<synchronous>, transform_indices = @transform_3, window_bounds = array<i64: 32, 128>}, {transform_indices = @transform_4, window_bounds = array<i64: 256, 128>}]} {
    %c0 = arith.constant 0 : index
    %c0_0 = arith.constant 0 : index
    %0 = vector.load %arg1[%c0, %c0_0] : memref<256x256xbf16, #tpu.memory_space<vmem>>, vector<256x256xbf16>
    %c0_1 = arith.constant 0 : index
    %c0_2 = arith.constant 0 : index
    %1 = vector.load %arg2[%c0_1, %c0_2] : memref<256x32xbf16, #tpu.memory_space<vmem>>, vector<256x32xbf16>
    %cst = arith.constant dense<0.000000e+00> : vector<256x32xf32>
    %2 = tpu.matmul %0, %1, %cst {dimension_numbers = #tpu.dot_dimension_numbers<[1], [0], [0], [1], [0, 0, 1, 1], [], []>} : vector<256x256xbf16>, vector<256x32xbf16>, vector<256x32xf32> -> vector<256x32xf32>
    %c0_3 = arith.constant 0 : index
    %c0_4 = arith.constant 0 : index
    %3 = vector.load %arg3[%c0_3, %c0_4] : memref<1x32xf32, #tpu.memory_space<vmem>>, vector<1x32xf32>
    %4 = vector.broadcast %3 : vector<1x32xf32> to vector<256x32xf32>
    %5 = arith.addf %2, %4 : vector<256x32xf32>
    %6 = math.tanh %5 : vector<256x32xf32>
    %7 = arith.truncf %6 : vector<256x32xf32> to vector<256x32xbf16>
    %c0_5 = arith.constant 0 : index
    %c0_6 = arith.constant 0 : index
    %8 = vector.load %arg4[%c0_5, %c0_6] : memref<32x128xbf16, #tpu.memory_space<vmem>>, vector<32x128xbf16>
    %cst_7 = arith.constant dense<0.000000e+00> : vector<256x128xf32>
    %9 = tpu.matmul %7, %8, %cst_7 {dimension_numbers = #tpu.dot_dimension_numbers<[1], [0], [0], [1], [0, 0, 1, 1], [], []>} : vector<256x32xbf16>, vector<32x128xbf16>, vector<256x128xf32> -> vector<256x128xf32>
    %10 = arith.truncf %9 : vector<256x128xf32> to vector<256x128xbf16>
    %c0_8 = arith.constant 0 : index
    %c0_9 = arith.constant 0 : index
    %11 = vector.load %arg5[%c0_8, %c0_9] : memref<256x128xbf16, #tpu.memory_space<vmem>>, vector<256x128xbf16>
    tpu.vector_store %arg5[%c0_8, %c0_9], %10 {strides = array<i32>} : memref<256x128xbf16, #tpu.memory_space<vmem>>, vector<256x128xbf16>,
    return
  }
  func.func @transform_0(%arg0: i32) -> (i32, i32) {
    %c0_i32 = arith.constant 0 : i32
    %c0_i32_0 = arith.constant 0 : i32
    return %arg0, %c0_i32 : i32, i32
  }
  func.func @transform_1(%arg0: i32) -> (i32, i32) {
    %c0_i32 = arith.constant 0 : i32
    %c0_i32_0 = arith.constant 0 : i32
    %c0_i32_1 = arith.constant 0 : i32
    return %c0_i32, %c0_i32_0 : i32, i32
  }
  func.func @transform_2(%arg0: i32) -> (i32, i32) {
    %c0_i32 = arith.constant 0 : i32
    %c0_i32_0 = arith.constant 0 : i32
    %c0_i32_1 = arith.constant 0 : i32
    return %c0_i32, %c0_i32_0 : i32, i32
  }
  func.func @transform_3(%arg0: i32) -> (i32, i32) {
    %c0_i32 = arith.constant 0 : i32
    %c0_i32_0 = arith.constant 0 : i32
    %c0_i32_1 = arith.constant 0 : i32
    return %c0_i32, %c0_i32_0 : i32, i32
  }
  func.func @transform_4(%arg0: i32) -> (i32, i32) {
    %c0_i32 = arith.constant 0 : i32
    %c0_i32_0 = arith.constant 0 : i32
    return %arg0, %c0_i32 : i32, i32
  }
}

</mosaic_0001>

<llo_original>
// kernel: tpu_custom_call.1
$region0: #{tpu_custom_call.1}
  #allocation0 [shape = 'u32[]', space=smem, size = 0x4, offset = 0x4, fixed_abs, tag = 'smem constant byte address 0x4 - core index']
  #allocation1 [shape = 'u32[72,128]{1,0:T(1,128)}', space=vmem, size = 0x9000, scoped, tag = 'internal scratch']
  %s0 = inlined_call_operand.hbm [shape: bf16[256,256], index: 0, kind: input, shape index: {}]
  %s1 = inlined_call_operand.vmem [shape: bf16[256,32], index: 1, kind: input, shape index: {}]
  %s2 = inlined_call_operand.vmem [shape: f32[1,32], index: 2, kind: input, shape index: {}]
  %s3 = inlined_call_operand.vmem [shape: bf16[32,128], index: 3, kind: input, shape index: {}]
  %s4 = inlined_call_operand.hbm [shape: bf16[256,128], index: 4, kind: output, shape index: {}]
  %s5 = sld [smem:[#allocation0]]
  $region30: #{tpu_custom_call.1} parent=0
    _
  %s7 = ssub.s32 1, %s5
  %s8 = scalar_select 0, %s7, %s5
  $region1: #{tpu_custom_call.1} parent=0
    #allocation2 [shape = 'u8[131072]{0}', space=vmem, size = 0x20000, scoped, tag = 'input window, operand 0, single buffered']
    #allocation3 [shape = 's32[1]{0}', space=sflag, size = 0x4, scoped, tag = 'scoped memory for tpu_custom_call.1']
    #allocation4 [shape = 's32[1]{0}', space=sflag, size = 0x4, scoped, tag = 'scoped memory for tpu_custom_call.1']
    #allocation5 [shape = 'u8[65536]{0}', space=vmem, size = 0x10000, scoped, tag = 'output window, operand 0, single buffered']
    %9 = vsyncpa [#allocation3], 0
    %10 = vsyncpa [#allocation4], 0
    // Predicated region
    $region2: #{tpu_custom_call.1} parent=1 // pred_check
      _
    $region3: #{tpu_custom_call.1} parent=1 // pred_check_branch
      %12 = sbr.rel (0) target = $region5
    $region4: #{tpu_custom_call.1} parent=1 // pred_region
      %14 = vsyncadd [#allocation3], 0
      %s15 = sshll.u32 %s0, 4
      %s16 = int_to_ptr.hbm [resolvable:$true] %s15
      %s17 = sshll.u32 [#allocation2], 4
      %s18 = int_to_ptr.vmem [resolvable:$true] %s17
      %23 = dma.hbm_to_vmem [thread:$0]  %s16, 4096, %s18, [#allocation3], 128, 128, 8
    $region5: #{tpu_custom_call.1} parent=1 // pred_fallthru
      _
    // Predicated region
    $region6: #{tpu_custom_call.1} parent=1 // pred_check
      _
    $region7: #{tpu_custom_call.1} parent=1 // pred_check_branch
      %25 = sbr.rel (0) target = $region9
    $region8: #{tpu_custom_call.1} parent=1 // pred_region
      _
    $region9: #{tpu_custom_call.1} parent=1 // pred_fallthru
      _
    // Predicated region
    $region10: #{tpu_custom_call.1} parent=1 // pred_check
      _
    $region11: #{tpu_custom_call.1} parent=1 // pred_check_branch
      %27 = sbr.rel (0) target = $region13
    $region12: #{tpu_custom_call.1} parent=1 // pred_region
      _
    $region13: #{tpu_custom_call.1} parent=1 // pred_fallthru
      _
    // Predicated region
    $region14: #{tpu_custom_call.1} parent=1 // pred_check
      _
    $region15: #{tpu_custom_call.1} parent=1 // pred_check_branch
      %29 = sbr.rel (0) target = $region17
    $region16: #{tpu_custom_call.1} parent=1 // pred_region
      _
    $region17: #{tpu_custom_call.1} parent=1 // pred_fallthru
      _
    // Predicated region
    $region18: #{tpu_custom_call.1} parent=1 // pred_check
      _
    $region19: #{tpu_custom_call.1} parent=1 // pred_check_branch
      %31 = sbr.rel (0) target = $region21
    $region20: #{tpu_custom_call.1} parent=1 // pred_region
      %33 = dma.done [#allocation3], 4096
    $region21: #{tpu_custom_call.1} parent=1 // pred_fallthru
      _
    %v35 = vld [vmem:[#allocation2] sm:$0xff]
    %v36 = vld [vmem:[#allocation2 + $0x8] sm:$0xff]
    %v37 = vld [vmem:[#allocation2 + $0x10] sm:$0xff]
    %v38 = vld [vmem:[#allocation2 + $0x18] sm:$0xff]
    %v39 = vld [vmem:[#allocation2 + $0x20] sm:$0xff]
    %v40 = vld [vmem:[#allocation2 + $0x28] sm:$0xff]
    %v41 = vld [vmem:[#allocation2 + $0x30] sm:$0xff]
    %v42 = vld [vmem:[#allocation2 + $0x38] sm:$0xff]
    %v43 = vld [vmem:[#allocation2 + $0x40] sm:$0xff]
    %v44 = vld [vmem:[#allocation2 + $0x48] sm:$0xff]
    %v45 = vld [vmem:[#allocation2 + $0x50] sm:$0xff]
    %v46 = vld [vmem:[#allocation2 + $0x58] sm:$0xff]
    %v47 = vld [vmem:[#allocation2 + $0x60] sm:$0xff]
    %v48 = vld [vmem:[#allocation2 + $0x68] sm:$0xff]
    %v49 = vld [vmem:[#allocation2 + $0x70] sm:$0xff]
    %v50 = vld [vmem:[#allocation2 + $0x78] sm:$0xff]
    %v51 = vld [vmem:[#allocation2 + $0x80] sm:$0xff]
    %v52 = vld [vmem:[#allocation2 + $0x88] sm:$0xff]
    %v53 = vld [vmem:[#allocation2 + $0x90] sm:$0xff]
    %v54 = vld [vmem:[#allocation2 + $0x98] sm:$0xff]
    %v55 = vld [vmem:[#allocation2 + $0xa0] sm:$0xff]
    %v56 = vld [vmem:[#allocation2 + $0xa8] sm:$0xff]
    %v57 = vld [vmem:[#allocation2 + $0xb0] sm:$0xff]
    %v58 = vld [vmem:[#allocation2 + $0xb8] sm:$0xff]
    %v59 = vld [vmem:[#allocation2 + $0xc0] sm:$0xff]
    %v60 = vld [vmem:[#allocation2 + $0xc8] sm:$0xff]
    %v61 = vld [vmem:[#allocation2 + $0xd0] sm:$0xff]
    %v62 = vld [vmem:[#allocation2 + $0xd8] sm:$0xff]
    %v63 = vld [vmem:[#allocation2 + $0xe0] sm:$0xff]
    %v64 = vld [vmem:[#allocation2 + $0xe8] sm:$0xff]
    %v65 = vld [vmem:[#allocation2 + $0xf0] sm:$0xff]
    %v66 = vld [vmem:[#allocation2 + $0xf8] sm:$0xff]
    %v67 = vld [vmem:[%s1] sm:$0xf]
    %v68 = vld [vmem:[%s1 + $0x4] sm:$0xf]
    %v69 = vld [vmem:[%s1 + $0x8] sm:$0xf]
    %v70 = vld [vmem:[%s1 + $0xc] sm:$0xf]
    %v71 = vld [vmem:[%s1 + $0x10] sm:$0xf]
    %v72 = vld [vmem:[%s1 + $0x14] sm:$0xf]
    %v73 = vld [vmem:[%s1 + $0x18] sm:$0xf]
    %v74 = vld [vmem:[%s1 + $0x1c] sm:$0xf]
    %v75 = vld [vmem:[%s1 + $0x20] sm:$0xf]
    %v76 = vld [vmem:[%s1 + $0x24] sm:$0xf]
    %v77 = vld [vmem:[%s1 + $0x28] sm:$0xf]
    %v78 = vld [vmem:[%s1 + $0x2c] sm:$0xf]
    %v79 = vld [vmem:[%s1 + $0x30] sm:$0xf]
    %v80 = vld [vmem:[%s1 + $0x34] sm:$0xf]
    %v81 = vld [vmem:[%s1 + $0x38] sm:$0xf]
    %v82 = vld [vmem:[%s1 + $0x3c] sm:$0xf]
    %v83 = vld [vmem:[%s1 + $0x40] sm:$0xf]
    %v84 = vld [vmem:[%s1 + $0x44] sm:$0xf]
    %v85 = vld [vmem:[%s1 + $0x48] sm:$0xf]
    %v86 = vld [vmem:[%s1 + $0x4c] sm:$0xf]
    %v87 = vld [vmem:[%s1 + $0x50] sm:$0xf]
    %v88 = vld [vmem:[%s1 + $0x54] sm:$0xf]
    %v89 = vld [vmem:[%s1 + $0x58] sm:$0xf]
    %v90 = vld [vmem:[%s1 + $0x5c] sm:$0xf]
    %v91 = vld [vmem:[%s1 + $0x60] sm:$0xf]
    %v92 = vld [vmem:[%s1 + $0x64] sm:$0xf]
    %v93 = vld [vmem:[%s1 + $0x68] sm:$0xf]
    %v94 = vld [vmem:[%s1 + $0x6c] sm:$0xf]
    %v95 = vld [vmem:[%s1 + $0x70] sm:$0xf]
    %v96 = vld [vmem:[%s1 + $0x74] sm:$0xf]
    %v97 = vld [vmem:[%s1 + $0x78] sm:$0xf]
    %v98 = vld [vmem:[%s1 + $0x7c] sm:$0xf]
    %v99 = vld [vmem:[%s2] sm:$0x1]
    %v101 = vperm.slane %v99, 0
    %v135 = vunpack.c.l.b16 %v35
    %v136 = vunpack.c.h.b16 %v35
    %v137 = vunpack.c.l.b16 %v36
    %v138 = vunpack.c.h.b16 %v36
    %v139 = vunpack.c.l.b16 %v37
    %v140 = vunpack.c.h.b16 %v37
    %v141 = vunpack.c.l.b16 %v38
    %v142 = vunpack.c.h.b16 %v38
    %v143 = vunpack.c.l.b16 %v39
    %v144 = vunpack.c.h.b16 %v39
    %v145 = vunpack.c.l.b16 %v40
    %v146 = vunpack.c.h.b16 %v40
    %v147 = vunpack.c.l.b16 %v41
    %v148 = vunpack.c.h.b16 %v41
    %v149 = vunpack.c.l.b16 %v42
    %v150 = vunpack.c.h.b16 %v42
    %v151 = vunpack.c.l.b16 %v43
    %v152 = vunpack.c.h.b16 %v43
    %v153 = vunpack.c.l.b16 %v44
    %v154 = vunpack.c.h.b16 %v44
    %v155 = vunpack.c.l.b16 %v45
    %v156 = vunpack.c.h.b16 %v45
    %v157 = vunpack.c.l.b16 %v46
    %v158 = vunpack.c.h.b16 %v46
    %v159 = vunpack.c.l.b16 %v47
    %v160 = vunpack.c.h.b16 %v47
    %v161 = vunpack.c.l.b16 %v48
    %v162 = vunpack.c.h.b16 %v48
    %v163 = vunpack.c.l.b16 %v49
    %v164 = vunpack.c.h.b16 %v49
    %v165 = vunpack.c.l.b16 %v50
    %v166 = vunpack.c.h.b16 %v50
    %v167 = vunpack.c.l.b16 %v51
    %v168 = vunpack.c.h.b16 %v51
    %v169 = vunpack.c.l.b16 %v52
    %v170 = vunpack.c.h.b16 %v52
    %v171 = vunpack.c.l.b16 %v53
    %v172 = vunpack.c.h.b16 %v53
    %v173 = vunpack.c.l.b16 %v54
    %v174 = vunpack.c.h.b16 %v54
    %v175 = vunpack.c.l.b16 %v55
    %v176 = vunpack.c.h.b16 %v55
    %v177 = vunpack.c.l.b16 %v56
    %v178 = vunpack.c.h.b16 %v56
    %v179 = vunpack.c.l.b16 %v57
    %v180 = vunpack.c.h.b16 %v57
    %v181 = vunpack.c.l.b16 %v58
    %v182 = vunpack.c.h.b16 %v58
    %v183 = vunpack.c.l.b16 %v59
    %v184 = vunpack.c.h.b16 %v59
    %v185 = vunpack.c.l.b16 %v60
    %v186 = vunpack.c.h.b16 %v60
    %v187 = vunpack.c.l.b16 %v61
    %v188 = vunpack.c.h.b16 %v61
    %v189 = vunpack.c.l.b16 %v62
    %v190 = vunpack.c.h.b16 %v62
    %v191 = vunpack.c.l.b16 %v63
    %v192 = vunpack.c.h.b16 %v63
    %v193 = vunpack.c.l.b16 %v64
    %v194 = vunpack.c.h.b16 %v64
    %v195 = vunpack.c.l.b16 %v65
    %v196 = vunpack.c.h.b16 %v65
    %v197 = vunpack.c.l.b16 %v66
    %v198 = vunpack.c.h.b16 %v66
    %v199 = vpack.c.b16 %v137, %v135
    %v200 = vpack.c.b16 %v138, %v136
    %v201 = vpack.c.b16 %v141, %v139
    %v202 = vpack.c.b16 %v142, %v140
    %v203 = vpack.c.b16 %v145, %v143
    %v204 = vpack.c.b16 %v146, %v144
    %v205 = vpack.c.b16 %v149, %v147
    %v206 = vpack.c.b16 %v150, %v148
    %v207 = vpack.c.b16 %v153, %v151
    %v208 = vpack.c.b16 %v154, %v152
    %v209 = vpack.c.b16 %v157, %v155
    %v210 = vpack.c.b16 %v158, %v156
    %v211 = vpack.c.b16 %v161, %v159
    %v212 = vpack.c.b16 %v162, %v160
    %v213 = vpack.c.b16 %v165, %v163
    %v214 = vpack.c.b16 %v166, %v164
    %v215 = vpack.c.b16 %v169, %v167
    %v216 = vpack.c.b16 %v170, %v168
    %v217 = vpack.c.b16 %v173, %v171
    %v218 = vpack.c.b16 %v174, %v172
    %v219 = vpack.c.b16 %v177, %v175
    %v220 = vpack.c.b16 %v178, %v176
    %v221 = vpack.c.b16 %v181, %v179
    %v222 = vpack.c.b16 %v182, %v180
    %v223 = vpack.c.b16 %v185, %v183
    %v224 = vpack.c.b16 %v186, %v184
    %v225 = vpack.c.b16 %v189, %v187
    %v226 = vpack.c.b16 %v190, %v188
    %v227 = vpack.c.b16 %v193, %v191
    %v228 = vpack.c.b16 %v194, %v192
    %v229 = vpack.c.b16 %v197, %v195
    %v230 = vpack.c.b16 %v198, %v196
    %v295 = vunpack.c.l.b16 %v67
    %v296 = vunpack.c.l.b16 %v68
    %v297 = vunpack.c.l.b16 %v69
    %v298 = vunpack.c.l.b16 %v70
    %v299 = vunpack.c.l.b16 %v71
    %v300 = vunpack.c.l.b16 %v72
    %v301 = vunpack.c.l.b16 %v73
    %v302 = vunpack.c.l.b16 %v74
    %v303 = vunpack.c.l.b16 %v75
    %v304 = vunpack.c.l.b16 %v76
    %v305 = vunpack.c.l.b16 %v77
    %v306 = vunpack.c.l.b16 %v78
    %v307 = vunpack.c.l.b16 %v79
    %v308 = vunpack.c.l.b16 %v80
    %v309 = vunpack.c.l.b16 %v81
    %v310 = vunpack.c.l.b16 %v82
    %v311 = vunpack.c.l.b16 %v83
    %v312 = vunpack.c.l.b16 %v84
    %v313 = vunpack.c.l.b16 %v85
    %v314 = vunpack.c.l.b16 %v86
    %v315 = vunpack.c.l.b16 %v87
    %v316 = vunpack.c.l.b16 %v88
    %v317 = vunpack.c.l.b16 %v89
    %v318 = vunpack.c.l.b16 %v90
    %v319 = vunpack.c.l.b16 %v91
    %v320 = vunpack.c.l.b16 %v92
    %v321 = vunpack.c.l.b16 %v93
    %v322 = vunpack.c.l.b16 %v94
    %v323 = vunpack.c.l.b16 %v95
    %v324 = vunpack.c.l.b16 %v96
    %v325 = vunpack.c.l.b16 %v97
    %v326 = vunpack.c.l.b16 %v98
    %v327 = vpack.c.b16 %v296, %v295
    %v328 = vpack.c.b16 %v298, %v297
    %v329 = vpack.c.b16 %v300, %v299
    %v330 = vpack.c.b16 %v302, %v301
    %v331 = vpack.c.b16 %v304, %v303
    %v332 = vpack.c.b16 %v306, %v305
    %v333 = vpack.c.b16 %v308, %v307
    %v334 = vpack.c.b16 %v310, %v309
    %v335 = vpack.c.b16 %v312, %v311
    %v336 = vpack.c.b16 %v314, %v313
    %v337 = vpack.c.b16 %v316, %v315
    %v338 = vpack.c.b16 %v318, %v317
    %v339 = vpack.c.b16 %v320, %v319
    %v340 = vpack.c.b16 %v322, %v321
    %v341 = vpack.c.b16 %v324, %v323
    %v342 = vpack.c.b16 %v326, %v325
    %359 = vmatpush.bf16.msra.mxu0 %v334
    %360 = vmatpush.bf16.msra.mxu0 %v333
    %361 = vmatpush.bf16.msra.mxu0 %v332
    %362 = vmatpush.bf16.msra.mxu0 %v331
    %363 = vmatpush.bf16.msra.mxu0 %v330
    %364 = vmatpush.bf16.msra.mxu0 %v329
    %365 = vmatpush.bf16.msra.mxu0 %v328
    %366 = vmatpush.bf16.msra.mxu0 %v327
    %367 = vmatmul.bf16.gmra.mxu0 %v199
    %v368 = vpop.f32.mrf.mxu0
    %v369 = vadd.f32 %v101, %v368
    %v370 = vpop.f32.mrf.mxu0
    %v371 = vadd.f32 %v101, %v370
    %372 = vmatmul.bf16.gmra.mxu0 %v201
    %v373 = vpop.f32.mrf.mxu0
    %v374 = vadd.f32 %v101, %v373
    %v375 = vpop.f32.mrf.mxu0
    %v376 = vadd.f32 %v101, %v375
    %377 = vmatmul.bf16.gmra.mxu0 %v203
    %v378 = vpop.f32.mrf.mxu0
    %v379 = vadd.f32 %v101, %v378
    %v380 = vpop.f32.mrf.mxu0
    %v381 = vadd.f32 %v101, %v380
    %382 = vmatmul.bf16.gmra.mxu0 %v205
    %v383 = vpop.f32.mrf.mxu0
    %v384 = vadd.f32 %v101, %v383
    %v385 = vpop.f32.mrf.mxu0
    %v386 = vadd.f32 %v101, %v385
    %387 = vmatmul.bf16.gmra.mxu0 %v207
    %v388 = vpop.f32.mrf.mxu0
    %v389 = vadd.f32 %v101, %v388
    %v390 = vpop.f32.mrf.mxu0
    %v391 = vadd.f32 %v101, %v390
    %392 = vmatmul.bf16.gmra.mxu0 %v209
    %v393 = vpop.f32.mrf.mxu0
    %v394 = vadd.f32 %v101, %v393
    %v395 = vpop.f32.mrf.mxu0
    %v396 = vadd.f32 %v101, %v395
    %397 = vmatmul.bf16.gmra.mxu0 %v211
    %v398 = vpop.f32.mrf.mxu0
    %v399 = vadd.f32 %v101, %v398
    %v400 = vpop.f32.mrf.mxu0
    %v401 = vadd.f32 %v101, %v400
    %402 = vmatmul.bf16.gmra.mxu0 %v213
    %v403 = vpop.f32.mrf.mxu0
    %v404 = vadd.f32 %v101, %v403
    %v405 = vpop.f32.mrf.mxu0
    %v406 = vadd.f32 %v101, %v405
    %407 = vmatmul.bf16.gmra.mxu0 %v215
    %v408 = vpop.f32.mrf.mxu0
    %v409 = vadd.f32 %v101, %v408
    %v410 = vpop.f32.mrf.mxu0
    %v411 = vadd.f32 %v101, %v410
    %412 = vmatmul.bf16.gmra.mxu0 %v217
    %v413 = vpop.f32.mrf.mxu0
    %v414 = vadd.f32 %v101, %v413
    %v415 = vpop.f32.mrf.mxu0
    %v416 = vadd.f32 %v101, %v415
    %417 = vmatmul.bf16.gmra.mxu0 %v219
    %v418 = vpop.f32.mrf.mxu0
    %v419 = vadd.f32 %v101, %v418
    %v420 = vpop.f32.mrf.mxu0
    %v421 = vadd.f32 %v101, %v420
    %422 = vmatmul.bf16.gmra.mxu0 %v221
    %v423 = vpop.f32.mrf.mxu0
    %v424 = vadd.f32 %v101, %v423
    %v425 = vpop.f32.mrf.mxu0
    %v426 = vadd.f32 %v101, %v425
    %427 = vmatmul.bf16.gmra.mxu0 %v223
    %v428 = vpop.f32.mrf.mxu0
    %v429 = vadd.f32 %v101, %v428
    %v430 = vpop.f32.mrf.mxu0
    %v431 = vadd.f32 %v101, %v430
    %432 = vmatmul.bf16.gmra.mxu0 %v225
    %v433 = vpop.f32.mrf.mxu0
    %v434 = vadd.f32 %v101, %v433
    %v435 = vpop.f32.mrf.mxu0
    %v436 = vadd.f32 %v101, %v435
    %437 = vmatmul.bf16.gmra.mxu0 %v227
    %v438 = vpop.f32.mrf.mxu0
    %v439 = vadd.f32 %v101, %v438
    %v440 = vpop.f32.mrf.mxu0
    %v441 = vadd.f32 %v101, %v440
    %442 = vmatmul.bf16.gmra.mxu0 %v229
    %v443 = vpop.f32.mrf.mxu0
    %v444 = vadd.f32 %v101, %v443
    %v445 = vpop.f32.mrf.mxu0
    %v446 = vadd.f32 %v101, %v445
    %447 = vdwg.mxu0
    %448 = vmatpush.bf16.msra.mxu0 %v342
    %449 = vmatpush.bf16.msra.mxu0 %v341
    %450 = vmatpush.bf16.msra.mxu0 %v340
    %451 = vmatpush.bf16.msra.mxu0 %v339
    %452 = vmatpush.bf16.msra.mxu0 %v338
    %453 = vmatpush.bf16.msra.mxu0 %v337
    %454 = vmatpush.bf16.msra.mxu0 %v336
    %455 = vmatpush.bf16.msra.mxu0 %v335
    %456 = vmatmul.bf16.gmra.mxu0 %v200
    %v457 = vpop.f32.mrf.mxu0
    %v458 = vadd.f32 %v369, %v457
    %v459 = vpop.f32.mrf.mxu0
    %v460 = vadd.f32 %v371, %v459
    %461 = vmatmul.bf16.gmra.mxu0 %v202
    %v462 = vpop.f32.mrf.mxu0
    %v463 = vadd.f32 %v374, %v462
    %v464 = vpop.f32.mrf.mxu0
    %v465 = vadd.f32 %v376, %v464
    %466 = vmatmul.bf16.gmra.mxu0 %v204
    %v467 = vpop.f32.mrf.mxu0
    %v468 = vadd.f32 %v379, %v467
    %v469 = vpop.f32.mrf.mxu0
    %v470 = vadd.f32 %v381, %v469
    %471 = vmatmul.bf16.gmra.mxu0 %v206
    %v472 = vpop.f32.mrf.mxu0
    %v473 = vadd.f32 %v384, %v472
    %v474 = vpop.f32.mrf.mxu0
    %v475 = vadd.f32 %v386, %v474
    %476 = vmatmul.bf16.gmra.mxu0 %v208
    %v477 = vpop.f32.mrf.mxu0
    %v478 = vadd.f32 %v389, %v477
    %v479 = vpop.f32.mrf.mxu0
    %v480 = vadd.f32 %v391, %v479
    %481 = vmatmul.bf16.gmra.mxu0 %v210
    %v482 = vpop.f32.mrf.mxu0
    %v483 = vadd.f32 %v394, %v482
    %v484 = vpop.f32.mrf.mxu0
    %v485 = vadd.f32 %v396, %v484
    %486 = vmatmul.bf16.gmra.mxu0 %v212
    %v487 = vpop.f32.mrf.mxu0
    %v488 = vadd.f32 %v399, %v487
    %v489 = vpop.f32.mrf.mxu0
    %v490 = vadd.f32 %v401, %v489
    %491 = vmatmul.bf16.gmra.mxu0 %v214
    %v492 = vpop.f32.mrf.mxu0
    %v493 = vadd.f32 %v404, %v492
    %v494 = vpop.f32.mrf.mxu0
    %v495 = vadd.f32 %v406, %v494
    %496 = vmatmul.bf16.gmra.mxu0 %v216
    %v497 = vpop.f32.mrf.mxu0
    %v498 = vadd.f32 %v409, %v497
    %v499 = vpop.f32.mrf.mxu0
    %v500 = vadd.f32 %v411, %v499
    %501 = vmatmul.bf16.gmra.mxu0 %v218
    %v502 = vpop.f32.mrf.mxu0
    %v503 = vadd.f32 %v414, %v502
    %v504 = vpop.f32.mrf.mxu0
    %v505 = vadd.f32 %v416, %v504
    %506 = vmatmul.bf16.gmra.mxu0 %v220
    %v507 = vpop.f32.mrf.mxu0
    %v508 = vadd.f32 %v419, %v507
    %v509 = vpop.f32.mrf.mxu0
    %v510 = vadd.f32 %v421, %v509
    %511 = vmatmul.bf16.gmra.mxu0 %v222
    %v512 = vpop.f32.mrf.mxu0
    %v513 = vadd.f32 %v424, %v512
    %v514 = vpop.f32.mrf.mxu0
    %v515 = vadd.f32 %v426, %v514
    %516 = vmatmul.bf16.gmra.mxu0 %v224
    %v517 = vpop.f32.mrf.mxu0
    %v518 = vadd.f32 %v429, %v517
    %v519 = vpop.f32.mrf.mxu0
    %v520 = vadd.f32 %v431, %v519
    %521 = vmatmul.bf16.gmra.mxu0 %v226
    %v522 = vpop.f32.mrf.mxu0
    %v523 = vadd.f32 %v434, %v522
    %v524 = vpop.f32.mrf.mxu0
    %v525 = vadd.f32 %v436, %v524
    %526 = vmatmul.bf16.gmra.mxu0 %v228
    %v527 = vpop.f32.mrf.mxu0
    %v528 = vadd.f32 %v439, %v527
    %v529 = vpop.f32.mrf.mxu0
    %v530 = vadd.f32 %v441, %v529
    %531 = vmatmul.bf16.gmra.mxu0 %v230
    %v532 = vpop.f32.mrf.mxu0
    %v533 = vadd.f32 %v444, %v532
    %v534 = vpop.f32.mrf.mxu0
    %v535 = vadd.f32 %v446, %v534
    %536 = vdwg.mxu0
    %v537 = vtanh.pop %v458
    %v538 = vtanh.pop %v460
    %v539 = vtanh.pop %v463
    %v540 = vtanh.pop %v465
    %v541 = vtanh.pop %v468
    %v542 = vtanh.pop %v470
    %v543 = vtanh.pop %v473
    %v544 = vtanh.pop %v475
    %v545 = vtanh.pop %v478
    %v546 = vtanh.pop %v480
    %v547 = vtanh.pop %v483
    %v548 = vtanh.pop %v485
    %v549 = vtanh.pop %v488
    %v550 = vtanh.pop %v490
    %v551 = vtanh.pop %v493
    %v552 = vtanh.pop %v495
    %v553 = vtanh.pop %v498
    %v554 = vtanh.pop %v500
    %v555 = vtanh.pop %v503
    %v556 = vtanh.pop %v505
    %v557 = vtanh.pop %v508
    %v558 = vtanh.pop %v510
    %v559 = vtanh.pop %v513
    %v560 = vtanh.pop %v515
    %v561 = vtanh.pop %v518
    %v562 = vtanh.pop %v520
    %v563 = vtanh.pop %v523
    %v564 = vtanh.pop %v525
    %v565 = vtanh.pop %v528
    %v566 = vtanh.pop %v530
    %v567 = vtanh.pop %v533
    %v568 = vtanh.pop %v535
    %v569 = vpack.c.bf16 %v538, %v537
    %v570 = vpack.c.bf16 %v540, %v539
    %v571 = vpack.c.bf16 %v542, %v541
    %v572 = vpack.c.bf16 %v544, %v543
    %v573 = vpack.c.bf16 %v546, %v545
    %v574 = vpack.c.bf16 %v548, %v547
    %v575 = vpack.c.bf16 %v550, %v549
    %v576 = vpack.c.bf16 %v552, %v551
    %v577 = vpack.c.bf16 %v554, %v553
    %v578 = vpack.c.bf16 %v556, %v555
    %v579 = vpack.c.bf16 %v558, %v557
    %v580 = vpack.c.bf16 %v560, %v559
    %v581 = vpack.c.bf16 %v562, %v561
    %v582 = vpack.c.bf16 %v564, %v563
    %v583 = vpack.c.bf16 %v566, %v565
    %v584 = vpack.c.bf16 %v568, %v567
    %v585 = vld [vmem:[%s3] sm:$0xf]
    %v586 = vld [vmem:[%s3 + $0x4] sm:$0xf]
    %v587 = vld [vmem:[%s3 + $0x8] sm:$0xf]
    %v588 = vld [vmem:[%s3 + $0xc] sm:$0xf]
    %v593 = vunpack.c.l.b16 %v585
    %v594 = vunpack.c.l.b16 %v586
    %v595 = vunpack.c.l.b16 %v587
    %v596 = vunpack.c.l.b16 %v588
    %v597 = vpack.c.b16 %v594, %v593
    %v598 = vpack.c.b16 %v596, %v595
    %vm601 = vcmask 261120
    %v603 = vsel %vm601, %v569, 0
    %v606 = vsel %vm601, %v570, 0
    %v609 = vsel %vm601, %v571, 0
    %v612 = vsel %vm601, %v572, 0
    %v615 = vsel %vm601, %v573, 0
    %v618 = vsel %vm601, %v574, 0
    %v621 = vsel %vm601, %v575, 0
    %v624 = vsel %vm601, %v576, 0
    %v627 = vsel %vm601, %v577, 0
    %v630 = vsel %vm601, %v578, 0
    %v633 = vsel %vm601, %v579, 0
    %v636 = vsel %vm601, %v580, 0
    %v639 = vsel %vm601, %v581, 0
    %v642 = vsel %vm601, %v582, 0
    %v645 = vsel %vm601, %v583, 0
    %v648 = vsel %vm601, %v584, 0
    %650 = vmatpush.bf16.msra.mxu0 0
    %651 = vmatpush.bf16.msra.mxu0 0
    %652 = vmatpush.bf16.msra.mxu0 0
    %653 = vmatpush.bf16.msra.mxu0 0
    %654 = vmatpush.bf16.msra.mxu0 0
    %655 = vmatpush.bf16.msra.mxu0 0
    %656 = vmatpush.bf16.msra.mxu0 %v598
    %657 = vmatpush.bf16.msra.mxu0 %v597
    %658 = vmatmul.bf16.gmra.mxu0 %v603
    %v659 = vpop.f32.mrf.mxu0
    %v660 = vadd.f32 0.0, %v659
    %v661 = vpop.f32.mrf.mxu0
    %v662 = vadd.f32 0.0, %v661
    %663 = vmatmul.bf16.gmra.mxu0 %v606
    %v664 = vpop.f32.mrf.mxu0
    %v665 = vadd.f32 0.0, %v664
    %v666 = vpop.f32.mrf.mxu0
    %v667 = vadd.f32 0.0, %v666
    %668 = vmatmul.bf16.gmra.mxu0 %v609
    %v669 = vpop.f32.mrf.mxu0
    %v670 = vadd.f32 0.0, %v669
    %v671 = vpop.f32.mrf.mxu0
    %v672 = vadd.f32 0.0, %v671
    %673 = vmatmul.bf16.gmra.mxu0 %v612
    %v674 = vpop.f32.mrf.mxu0
    %v675 = vadd.f32 0.0, %v674
    %v676 = vpop.f32.mrf.mxu0
    %v677 = vadd.f32 0.0, %v676
    %678 = vmatmul.bf16.gmra.mxu0 %v615
    %v679 = vpop.f32.mrf.mxu0
    %v680 = vadd.f32 0.0, %v679
    %v681 = vpop.f32.mrf.mxu0
    %v682 = vadd.f32 0.0, %v681
    %683 = vmatmul.bf16.gmra.mxu0 %v618
    %v684 = vpop.f32.mrf.mxu0
    %v685 = vadd.f32 0.0, %v684
    %v686 = vpop.f32.mrf.mxu0
    %v687 = vadd.f32 0.0, %v686
    %688 = vmatmul.bf16.gmra.mxu0 %v621
    %v689 = vpop.f32.mrf.mxu0
    %v690 = vadd.f32 0.0, %v689
    %v691 = vpop.f32.mrf.mxu0
    %v692 = vadd.f32 0.0, %v691
    %693 = vmatmul.bf16.gmra.mxu0 %v624
    %v694 = vpop.f32.mrf.mxu0
    %v695 = vadd.f32 0.0, %v694
    %v696 = vpop.f32.mrf.mxu0
    %v697 = vadd.f32 0.0, %v696
    %698 = vmatmul.bf16.gmra.mxu0 %v627
    %v699 = vpop.f32.mrf.mxu0
    %v700 = vadd.f32 0.0, %v699
    %v701 = vpop.f32.mrf.mxu0
    %v702 = vadd.f32 0.0, %v701
    %703 = vmatmul.bf16.gmra.mxu0 %v630
    %v704 = vpop.f32.mrf.mxu0
    %v705 = vadd.f32 0.0, %v704
    %v706 = vpop.f32.mrf.mxu0
    %v707 = vadd.f32 0.0, %v706
    %708 = vmatmul.bf16.gmra.mxu0 %v633
    %v709 = vpop.f32.mrf.mxu0
    %v710 = vadd.f32 0.0, %v709
    %v711 = vpop.f32.mrf.mxu0
    %v712 = vadd.f32 0.0, %v711
    %713 = vmatmul.bf16.gmra.mxu0 %v636
    %v714 = vpop.f32.mrf.mxu0
    %v715 = vadd.f32 0.0, %v714
    %v716 = vpop.f32.mrf.mxu0
    %v717 = vadd.f32 0.0, %v716
    %718 = vmatmul.bf16.gmra.mxu0 %v639
    %v719 = vpop.f32.mrf.mxu0
    %v720 = vadd.f32 0.0, %v719
    %v721 = vpop.f32.mrf.mxu0
    %v722 = vadd.f32 0.0, %v721
    %723 = vmatmul.bf16.gmra.mxu0 %v642
    %v724 = vpop.f32.mrf.mxu0
    %v725 = vadd.f32 0.0, %v724
    %v726 = vpop.f32.mrf.mxu0
    %v727 = vadd.f32 0.0, %v726
    %728 = vmatmul.bf16.gmra.mxu0 %v645
    %v729 = vpop.f32.mrf.mxu0
    %v730 = vadd.f32 0.0, %v729
    %v731 = vpop.f32.mrf.mxu0
    %v732 = vadd.f32 0.0, %v731
    %733 = vmatmul.bf16.gmra.mxu0 %v648
    %v734 = vpop.f32.mrf.mxu0
    %v735 = vadd.f32 0.0, %v734
    %v736 = vpop.f32.mrf.mxu0
    %v737 = vadd.f32 0.0, %v736
    %738 = vdwg.mxu0
    %v739 = vpack.c.bf16 %v660, %v660
    %v740 = vpack.c.bf16 %v662, %v662
    %v741 = vpack.c.bf16 %v665, %v665
    %v742 = vpack.c.bf16 %v667, %v667
    %v743 = vpack.c.bf16 %v670, %v670
    %v744 = vpack.c.bf16 %v672, %v672
    %v745 = vpack.c.bf16 %v675, %v675
    %v746 = vpack.c.bf16 %v677, %v677
    %v747 = vpack.c.bf16 %v680, %v680
    %v748 = vpack.c.bf16 %v682, %v682
    %v749 = vpack.c.bf16 %v685, %v685
    %v750 = vpack.c.bf16 %v687, %v687
    %v751 = vpack.c.bf16 %v690, %v690
    %v752 = vpack.c.bf16 %v692, %v692
    %v753 = vpack.c.bf16 %v695, %v695
    %v754 = vpack.c.bf16 %v697, %v697
    %v755 = vpack.c.bf16 %v700, %v700
    %v756 = vpack.c.bf16 %v702, %v702
    %v757 = vpack.c.bf16 %v705, %v705
    %v758 = vpack.c.bf16 %v707, %v707
    %v759 = vpack.c.bf16 %v710, %v710
    %v760 = vpack.c.bf16 %v712, %v712
    %v761 = vpack.c.bf16 %v715, %v715
    %v762 = vpack.c.bf16 %v717, %v717
    %v763 = vpack.c.bf16 %v720, %v720
    %v764 = vpack.c.bf16 %v722, %v722
    %v765 = vpack.c.bf16 %v725, %v725
    %v766 = vpack.c.bf16 %v727, %v727
    %v767 = vpack.c.bf16 %v730, %v730
    %v768 = vpack.c.bf16 %v732, %v732
    %v769 = vpack.c.bf16 %v735, %v735
    %v770 = vpack.c.bf16 %v737, %v737
    %771 = vst [vmem:[#allocation5] sm:$0xf] %v739
    %772 = vst [vmem:[#allocation5 + $0x4] sm:$0xf] %v740
    %773 = vst [vmem:[#allocation5 + $0x8] sm:$0xf] %v741
    %774 = vst [vmem:[#allocation5 + $0xc] sm:$0xf] %v742
    %775 = vst [vmem:[#allocation5 + $0x10] sm:$0xf] %v743
    %776 = vst [vmem:[#allocation5 + $0x14] sm:$0xf] %v744
    %777 = vst [vmem:[#allocation5 + $0x18] sm:$0xf] %v745
    %778 = vst [vmem:[#allocation5 + $0x1c] sm:$0xf] %v746
    %779 = vst [vmem:[#allocation5 + $0x20] sm:$0xf] %v747
    %780 = vst [vmem:[#allocation5 + $0x24] sm:$0xf] %v748
    %781 = vst [vmem:[#allocation5 + $0x28] sm:$0xf] %v749
    %782 = vst [vmem:[#allocation5 + $0x2c] sm:$0xf] %v750
    %783 = vst [vmem:[#allocation5 + $0x30] sm:$0xf] %v751
    %784 = vst [vmem:[#allocation5 + $0x34] sm:$0xf] %v752
    %785 = vst [vmem:[#allocation5 + $0x38] sm:$0xf] %v753
    %786 = vst [vmem:[#allocation5 + $0x3c] sm:$0xf] %v754
    %787 = vst [vmem:[#allocation5 + $0x40] sm:$0xf] %v755
    %788 = vst [vmem:[#allocation5 + $0x44] sm:$0xf] %v756
    %789 = vst [vmem:[#allocation5 + $0x48] sm:$0xf] %v757
    %790 = vst [vmem:[#allocation5 + $0x4c] sm:$0xf] %v758
    %791 = vst [vmem:[#allocation5 + $0x50] sm:$0xf] %v759
    %792 = vst [vmem:[#allocation5 + $0x54] sm:$0xf] %v760
    %793 = vst [vmem:[#allocation5 + $0x58] sm:$0xf] %v761
    %794 = vst [vmem:[#allocation5 + $0x5c] sm:$0xf] %v762
    %795 = vst [vmem:[#allocation5 + $0x60] sm:$0xf] %v763
    %796 = vst [vmem:[#allocation5 + $0x64] sm:$0xf] %v764
    %797 = vst [vmem:[#allocation5 + $0x68] sm:$0xf] %v765
    %798 = vst [vmem:[#allocation5 + $0x6c] sm:$0xf] %v766
    %799 = vst [vmem:[#allocation5 + $0x70] sm:$0xf] %v767
    %800 = vst [vmem:[#allocation5 + $0x74] sm:$0xf] %v768
    %801 = vst [vmem:[#allocation5 + $0x78] sm:$0xf] %v769
    %802 = vst [vmem:[#allocation5 + $0x7c] sm:$0xf] %v770
    // Predicated region
    $region22: #{tpu_custom_call.1} parent=1 // pred_check
      _
    $region23: #{tpu_custom_call.1} parent=1 // pred_check_branch
      %804 = sbr.rel (0) target = $region25
    $region24: #{tpu_custom_call.1} parent=1 // pred_region
      %806 = vsyncadd [#allocation4], 0
      %s807 = sshll.u32 [#allocation5], 4
      %s808 = int_to_ptr.vmem [resolvable:$true] %s807
      %s809 = sshll.u32 %s4, 4
      %s810 = int_to_ptr.hbm [resolvable:$true] %s809
      %815 = dma.vmem_to_hbm [thread:$0]  %s808, 2048, %s810, [#allocation4], 64, 64, 4
    $region25: #{tpu_custom_call.1} parent=1 // pred_fallthru
      _
    // Predicated region
    $region26: #{tpu_custom_call.1} parent=1 // pred_check
      _
    $region27: #{tpu_custom_call.1} parent=1 // pred_check_branch
      %817 = sbr.rel (0) target = $region29
    $region28: #{tpu_custom_call.1} parent=1 // pred_region
      %819 = dma.done [#allocation4], 2048
    $region29: #{tpu_custom_call.1} parent=1 // pred_fallthru
      _
    %820 = vsyncpa [#allocation3], 1
    %821 = vsyncpa [#allocation4], 1

</llo_original>
